<compile_context>
chip_gen: v7x
topology: tpu7x:2x2x1
jax: 0.10.0
libtpu: 0.0.40
codegen_flags: <defaults>
</compile_context>

<pallas_src>
import jax
import jax.numpy as jnp
from jax.experimental import pallas as pl
from jax.experimental.pallas import tpu as pltpu


def _unet_up_kernel(x_ref, w1_ref, b1_ref, w2_ref, b2_ref, mask_ref, o_ref):
    """Fused conv3x3 -> conv3x3 over the batch-stacked, padded, lane-dense input.

    x_ref   : (R, (W+2)*Cin)             bf16, R = N*(H+2), per-image 1-px padded
    w1_ref  : (3, (W+2)*Cin, (W+2)*Cout) bf16, width-Toeplitz conv1 weights
    b1_ref  : (1, (W+2)*Cout)            f32,  conv1 bias (zero in pad columns)
    w2_ref  : (3, (W+2)*Cout, W*Cout)    bf16, width-Toeplitz conv2 weights
    b2_ref  : (1, W*Cout)                f32
    mask_ref: (R-2, 1)                   f32,  0 on per-image top/bottom pad rows
    o_ref   : (N, H, W*Cout)             f32
    """
    R = x_ref.shape[0]
    Kmid = b1_ref.shape[1]
    N, H = o_ref.shape[0], o_ref.shape[1]
    Hp = H + 2
    M = R - 2
    f32 = jnp.float32

    x = x_ref[...]                                          # (R, (W+2)*Cin) bf16

    # ---- conv1: 3 accumulating MXU matmuls over the kernel row dy -----------
    acc = jnp.dot(x[0:M, :], w1_ref[0], preferred_element_type=f32)
    acc += jnp.dot(x[1:1 + M, :], w1_ref[1], preferred_element_type=f32)
    acc += jnp.dot(x[2:2 + M, :], w1_ref[2], preferred_element_type=f32)
    # Bias, then force the per-image pad rows back to zero (they are conv2's
    # height padding; the stacked matmul wrote cross-image garbage there).
    mid = ((acc + b1_ref[...]) * mask_ref[...]).astype(jnp.bfloat16)   # (M, Kmid)

    # Restore the outermost top/bottom pad rows (first/last image of the stack).
    zrow = jnp.zeros((1, Kmid), jnp.bfloat16)
    midp = jnp.concatenate([zrow, mid, zrow], axis=0)       # (R, Kmid)

    # ---- conv2: same 3-matmul structure; accumulator is already lane-dense --
    out = jnp.dot(midp[0:M, :], w2_ref[0], preferred_element_type=f32)
    out += jnp.dot(midp[1:1 + M, :], w2_ref[1], preferred_element_type=f32)
    out += jnp.dot(midp[2:2 + M, :], w2_ref[2], preferred_element_type=f32)
    out += b2_ref[...]                                      # (M, W*Cout) f32

    # Drop the per-image pad rows: full-width stores of H rows per image.
    for n in range(N):
        o_ref[n] = out[n * Hp:n * Hp + H, :].astype(o_ref.dtype)


def _banded_conv_weight(w, width, pad_out):
    """PyTorch OIHW (Cout, Cin, 3, 3) weights -> width-Toeplitz matrices.

    Returns (3, (width+2)*Cin, Xout*Cout) with Xout = width+2 if pad_out else
    width, such that for a lane-dense padded row r_in (length (width+2)*Cin):
        out_row = sum_dy in_row[dy] @ band[dy]
    computes the 3x3 'same' convolution along the width axis (pad columns of
    the output are exactly zero when pad_out=True).
    """
    cout, cin = w.shape[0], w.shape[1]
    xin = width + 2
    xout = width + 2 if pad_out else width
    off = 1 if pad_out else 0
    xs = jnp.arange(width)
    bands = []
    for dy in range(3):
        m = jnp.zeros((xin * cin, xout * cout), jnp.float32)
        for dx in range(3):
            sel = jnp.zeros((xin, xout), jnp.float32).at[xs + dx, xs + off].set(1.0)
            m = m + jnp.kron(sel, w[:, :, dy, dx].T.astype(jnp.float32))
        bands.append(m)
    return jnp.stack(bands, axis=0)


def unet_up_pallas(input1, input2, w1, b1, w2, b2):
    """input1: (N, C1, H, W), input2: (N, C2, H//2, W//2), NCHW (PyTorch-like).

    Weights follow PyTorch Conv2d conventions: w* is (Cout, Cin, 3, 3), b* (Cout,).
    Returns (N, Cout, H, W) NCHW float32.
    """
    N, C1, H, W = input1.shape
    C2 = input2.shape[1]
    Cin = C1 + C2
    Cout = w1.shape[0]
    Hp, Wp = H + 2, W + 2
    R = N * Hp
    M = R - 2
    cdt = jnp.bfloat16

    # Upsample(2x nearest) + channel concat + 1-px zero pad + lane-dense reshape,
    # all fused by XLA in the wrapper; the kernel gets one (R, Wp*Cin) bf16 slab.
    x1 = jnp.transpose(input1, (0, 2, 3, 1))                       # (N, H, W, C1)
    x2 = jnp.transpose(input2, (0, 2, 3, 1))                       # (N, H/2, W/2, C2)
    x2 = jnp.repeat(jnp.repeat(x2, 2, axis=1), 2, axis=2)          # (N, H, W, C2)
    x = jnp.concatenate([x1, x2], axis=-1)                         # (N, H, W, Cin)
    x = jnp.pad(x, ((0, 0), (1, 1), (1, 1), (0, 0)))               # (N, Hp, Wp, Cin)
    x = x.reshape(R, Wp * Cin).astype(cdt)                         # lane-dense

    # Width-Toeplitz weight matrices (one per kernel row dy) + padded biases.
    w1b = _banded_conv_weight(w1, W, pad_out=True).astype(cdt)     # (3, Wp*Cin, Wp*Cout)
    w2b = _banded_conv_weight(w2, W, pad_out=False).astype(cdt)    # (3, Wp*Cout, W*Cout)
    b1p = jnp.pad(jnp.tile(b1, W), (Cout, Cout)).reshape(1, Wp * Cout).astype(jnp.float32)
    b2p = jnp.tile(b2, W).reshape(1, W * Cout).astype(jnp.float32)

    # Rows of the stacked interior that are per-image top/bottom zero padding.
    yp = jnp.arange(1, R - 1) % Hp
    mask = ((yp >= 1) & (yp <= H)).astype(jnp.float32).reshape(M, 1)

    vmem = pl.BlockSpec(memory_space=pltpu.MemorySpace.VMEM)
    out = pl.pallas_call(
        _unet_up_kernel,
        out_shape=jax.ShapeDtypeStruct((N, H, W * Cout), jnp.float32),
        in_specs=[vmem] * 6,
        out_specs=vmem,
    )(x, w1b, b1p, w2b, b2p, mask)

    out = out.reshape(N, H, W, Cout)            # row-major identical: free
    return jnp.transpose(out, (0, 3, 1, 2))     # back to NCHW


def unet_up_reference(input1, input2, w1, b1, w2, b2):
    """Pure-JAX f32 reference matching the PyTorch forward exactly (NCHW)."""
    up2 = jnp.repeat(jnp.repeat(input2, 2, axis=2), 2, axis=3)
    x = jnp.concatenate([input1, up2], axis=1)
    dn = ("NCHW", "OIHW", "NCHW")
    y = jax.lax.conv_general_dilated(x, w1, (1, 1), [(1, 1), (1, 1)],
                                     dimension_numbers=dn) + b1[None, :, None, None]
    y = jax.lax.conv_general_dilated(y, w2, (1, 1), [(1, 1), (1, 1)],
                                     dimension_numbers=dn) + b2[None, :, None, None]
    return y


if __name__ == "__main__":
    # Small shapes consistent with the module: in_size = C1 + C2, out_size = 8.
    N, C1, C2, H, W = 2, 4, 4, 16, 16
    in_size, out_size = C1 + C2, 8

    key = jax.random.PRNGKey(0)
    k1, k2, k3, k4, k5, k6 = jax.random.split(key, 6)
    input1 = jax.random.normal(k1, (N, C1, H, W), jnp.float32)
    input2 = jax.random.normal(k2, (N, C2, H // 2, W // 2), jnp.float32)

    # Deterministic synthetic parameters (nn.Conv2d(in_size/out_size, k=3, pad=1)).
    w1 = 0.1 * jax.random.normal(k3, (out_size, in_size, 3, 3), jnp.float32)
    b1 = 0.1 * jax.random.normal(k4, (out_size,), jnp.float32)
    w2 = 0.1 * jax.random.normal(k5, (out_size, out_size, 3, 3), jnp.float32)
    b2 = 0.1 * jax.random.normal(k6, (out_size,), jnp.float32)

    run = jax.jit(unet_up_pallas)
    out = jax.block_until_ready(run(input1, input2, w1, b1, w2, b2))

    ref = unet_up_reference(input1, input2, w1, b1, w2, b2)
    assert out.shape == (N, out_size, H, W), out.shape
    max_err = float(jnp.max(jnp.abs(out.astype(jnp.float32) - ref)))
    # bf16 MXU inputs with f32 accumulation (and a bf16 conv1->conv2 hand-off)
    # -> looser tolerance than pure f32.
    if max_err > 5e-2:
        raise AssertionError(f"Pallas kernel mismatch vs reference, max_err={max_err}")
    print("KERNEL_OK")
</pallas_src>

<mosaic_0001>
module attributes {stable_mosaic.version = 11 : i64} {
  func.func @_unet_up_kernel(%arg0: memref<36x144xbf16, #tpu.memory_space<vmem>>, %arg1: memref<3x144x144xbf16, #tpu.memory_space<vmem>>, %arg2: memref<1x144xf32, #tpu.memory_space<vmem>>, %arg3: memref<3x144x128xbf16, #tpu.memory_space<vmem>>, %arg4: memref<1x128xf32, #tpu.memory_space<vmem>>, %arg5: memref<34x1xf32, #tpu.memory_space<vmem>>, %arg6: memref<2x16x128xf32, #tpu.memory_space<vmem>>) attributes {dimension_semantics = [], scalar_prefetch = 0 : i64, scratch_operands = 0 : i64, tpu.core_type = #tpu.core_type<tc>} {
    %c0 = arith.constant 0 : index
    %c0_0 = arith.constant 0 : index
    %0 = vector.load %arg0[%c0, %c0_0] : memref<36x144xbf16, #tpu.memory_space<vmem>>, vector<36x144xbf16>
    %1 = vector.extract_strided_slice %0 {offsets = [0, 0], sizes = [34, 144], strides = [1, 1]} : vector<36x144xbf16> to vector<34x144xbf16>
    %c0_1 = arith.constant 0 : index
    %c0_2 = arith.constant 0 : index
    %c0_3 = arith.constant 0 : index
    %2 = vector.load %arg1[%c0_1, %c0_2, %c0_3] : memref<3x144x144xbf16, #tpu.memory_space<vmem>>, vector<1x144x144xbf16>
    %3 = vector.shape_cast %2 : vector<1x144x144xbf16> to vector<144x144xbf16>
    %cst = arith.constant dense<0.000000e+00> : vector<34x144xf32>
    %4 = tpu.matmul %1, %3, %cst {dimension_numbers = #tpu.dot_dimension_numbers<[1], [0], [0], [1], [0, 0, 1, 1], [], []>} : vector<34x144xbf16>, vector<144x144xbf16>, vector<34x144xf32> -> vector<34x144xf32>
    %5 = vector.extract_strided_slice %0 {offsets = [1, 0], sizes = [34, 144], strides = [1, 1]} : vector<36x144xbf16> to vector<34x144xbf16>
    %c1 = arith.constant 1 : index
    %c0_4 = arith.constant 0 : index
    %c0_5 = arith.constant 0 : index
    %6 = vector.load %arg1[%c1, %c0_4, %c0_5] : memref<3x144x144xbf16, #tpu.memory_space<vmem>>, vector<1x144x144xbf16>
    %7 = vector.shape_cast %6 : vector<1x144x144xbf16> to vector<144x144xbf16>
    %cst_6 = arith.constant dense<0.000000e+00> : vector<34x144xf32>
    %8 = tpu.matmul %5, %7, %cst_6 {dimension_numbers = #tpu.dot_dimension_numbers<[1], [0], [0], [1], [0, 0, 1, 1], [], []>} : vector<34x144xbf16>, vector<144x144xbf16>, vector<34x144xf32> -> vector<34x144xf32>
    %9 = arith.addf %4, %8 : vector<34x144xf32>
    %10 = vector.extract_strided_slice %0 {offsets = [2, 0], sizes = [34, 144], strides = [1, 1]} : vector<36x144xbf16> to vector<34x144xbf16>
    %c2 = arith.constant 2 : index
    %c0_7 = arith.constant 0 : index
    %c0_8 = arith.constant 0 : index
    %11 = vector.load %arg1[%c2, %c0_7, %c0_8] : memref<3x144x144xbf16, #tpu.memory_space<vmem>>, vector<1x144x144xbf16>
    %12 = vector.shape_cast %11 : vector<1x144x144xbf16> to vector<144x144xbf16>
    %cst_9 = arith.constant dense<0.000000e+00> : vector<34x144xf32>
    %13 = tpu.matmul %10, %12, %cst_9 {dimension_numbers = #tpu.dot_dimension_numbers<[1], [0], [0], [1], [0, 0, 1, 1], [], []>} : vector<34x144xbf16>, vector<144x144xbf16>, vector<34x144xf32> -> vector<34x144xf32>
    %14 = arith.addf %9, %13 : vector<34x144xf32>
    %c0_10 = arith.constant 0 : index
    %c0_11 = arith.constant 0 : index
    %15 = vector.load %arg2[%c0_10, %c0_11] : memref<1x144xf32, #tpu.memory_space<vmem>>, vector<1x144xf32>
    %16 = vector.broadcast %15 : vector<1x144xf32> to vector<34x144xf32>
    %17 = arith.addf %14, %16 : vector<34x144xf32>
    %c0_12 = arith.constant 0 : index
    %c0_13 = arith.constant 0 : index
    %18 = vector.load %arg5[%c0_12, %c0_13] : memref<34x1xf32, #tpu.memory_space<vmem>>, vector<34x1xf32>
    %19 = vector.broadcast %18 : vector<34x1xf32> to vector<34x144xf32>
    %20 = arith.mulf %17, %19 : vector<34x144xf32>
    %21 = arith.truncf %20 : vector<34x144xf32> to vector<34x144xbf16>
    %cst_14 = arith.constant 0.000000e+00 : bf16
    %22 = vector.broadcast %cst_14 : bf16 to vector<1x144xbf16>
    %23 = tpu.concatenate %22, %21, %22 in 0 : vector<1x144xbf16>, vector<34x144xbf16>, vector<1x144xbf16> -> vector<36x144xbf16>
    %24 = vector.extract_strided_slice %23 {offsets = [0, 0], sizes = [34, 144], strides = [1, 1]} : vector<36x144xbf16> to vector<34x144xbf16>
    %c0_15 = arith.constant 0 : index
    %c0_16 = arith.constant 0 : index
    %c0_17 = arith.constant 0 : index
    %25 = vector.load %arg3[%c0_15, %c0_16, %c0_17] : memref<3x144x128xbf16, #tpu.memory_space<vmem>>, vector<1x144x128xbf16>
    %26 = vector.shape_cast %25 : vector<1x144x128xbf16> to vector<144x128xbf16>
    %cst_18 = arith.constant dense<0.000000e+00> : vector<34x128xf32>
    %27 = tpu.matmul %24, %26, %cst_18 {dimension_numbers = #tpu.dot_dimension_numbers<[1], [0], [0], [1], [0, 0, 1, 1], [], []>} : vector<34x144xbf16>, vector<144x128xbf16>, vector<34x128xf32> -> vector<34x128xf32>
    %28 = vector.extract_strided_slice %23 {offsets = [1, 0], sizes = [34, 144], strides = [1, 1]} : vector<36x144xbf16> to vector<34x144xbf16>
    %c1_19 = arith.constant 1 : index
    %c0_20 = arith.constant 0 : index
    %c0_21 = arith.constant 0 : index
    %29 = vector.load %arg3[%c1_19, %c0_20, %c0_21] : memref<3x144x128xbf16, #tpu.memory_space<vmem>>, vector<1x144x128xbf16>
    %30 = vector.shape_cast %29 : vector<1x144x128xbf16> to vector<144x128xbf16>
    %cst_22 = arith.constant dense<0.000000e+00> : vector<34x128xf32>
    %31 = tpu.matmul %28, %30, %cst_22 {dimension_numbers = #tpu.dot_dimension_numbers<[1], [0], [0], [1], [0, 0, 1, 1], [], []>} : vector<34x144xbf16>, vector<144x128xbf16>, vector<34x128xf32> -> vector<34x128xf32>
    %32 = arith.addf %27, %31 : vector<34x128xf32>
    %33 = vector.extract_strided_slice %23 {offsets = [2, 0], sizes = [34, 144], strides = [1, 1]} : vector<36x144xbf16> to vector<34x144xbf16>
    %c2_23 = arith.constant 2 : index
    %c0_24 = arith.constant 0 : index
    %c0_25 = arith.constant 0 : index
    %34 = vector.load %arg3[%c2_23, %c0_24, %c0_25] : memref<3x144x128xbf16, #tpu.memory_space<vmem>>, vector<1x144x128xbf16>
    %35 = vector.shape_cast %34 : vector<1x144x128xbf16> to vector<144x128xbf16>
    %cst_26 = arith.constant dense<0.000000e+00> : vector<34x128xf32>
    %36 = tpu.matmul %33, %35, %cst_26 {dimension_numbers = #tpu.dot_dimension_numbers<[1], [0], [0], [1], [0, 0, 1, 1], [], []>} : vector<34x144xbf16>, vector<144x128xbf16>, vector<34x128xf32> -> vector<34x128xf32>
    %37 = arith.addf %32, %36 : vector<34x128xf32>
    %c0_27 = arith.constant 0 : index
    %c0_28 = arith.constant 0 : index
    %38 = vector.load %arg4[%c0_27, %c0_28] : memref<1x128xf32, #tpu.memory_space<vmem>>, vector<1x128xf32>
    %39 = vector.broadcast %38 : vector<1x128xf32> to vector<34x128xf32>
    %40 = arith.addf %37, %39 : vector<34x128xf32>
    %41 = vector.extract_strided_slice %40 {offsets = [0, 0], sizes = [16, 128], strides = [1, 1]} : vector<34x128xf32> to vector<16x128xf32>
    %c0_29 = arith.constant 0 : index
    %c0_30 = arith.constant 0 : index
    %c0_31 = arith.constant 0 : index
    %42 = vector.load %arg6[%c0_29, %c0_30, %c0_31] : memref<2x16x128xf32, #tpu.memory_space<vmem>>, vector<1x16x128xf32>
    %43 = vector.shape_cast %42 : vector<1x16x128xf32> to vector<16x128xf32>
    %44 = vector.shape_cast %41 : vector<16x128xf32> to vector<1x16x128xf32>
    tpu.vector_store %arg6[%c0_29, %c0_30, %c0_31], %44 {strides = array<i32>} : memref<2x16x128xf32, #tpu.memory_space<vmem>>, vector<1x16x128xf32>,
    %45 = vector.extract_strided_slice %40 {offsets = [18, 0], sizes = [16, 128], strides = [1, 1]} : vector<34x128xf32> to vector<16x128xf32>
    %c1_32 = arith.constant 1 : index
    %c0_33 = arith.constant 0 : index
    %c0_34 = arith.constant 0 : index
    %46 = vector.load %arg6[%c1_32, %c0_33, %c0_34] : memref<2x16x128xf32, #tpu.memory_space<vmem>>, vector<1x16x128xf32>
    %47 = vector.shape_cast %46 : vector<1x16x128xf32> to vector<16x128xf32>
    %48 = vector.shape_cast %45 : vector<16x128xf32> to vector<1x16x128xf32>
    tpu.vector_store %arg6[%c1_32, %c0_33, %c0_34], %48 {strides = array<i32>} : memref<2x16x128xf32, #tpu.memory_space<vmem>>, vector<1x16x128xf32>,
    return
  }
}

</mosaic_0001>

<llo_original>
// kernel: tile.13
$region0: #{tile.13}
  #allocation0 [shape = 's32[1]{0}', space=sflag, size = 0x4, scoped, tag = 'scoped memory for tile.13']
  %s0 = inlined_call_operand.vmem [shape: f32[8], index: 0, kind: input, shape index: {}]
  %s1 = inlined_call_operand.vmem [shape: f32[16,8], index: 1, kind: output, shape index: {}]
  // Predicated region
  $region2: #{tile.13} parent=0 // pred_check
    _
  $region3: #{tile.13} parent=0 // pred_check_branch
    %3 = sbr.rel (0) target = $region5
  $region4: #{tile.13} parent=0 // pred_region
    _
  $region5: #{tile.13} parent=0 // pred_fallthru
    _
  %v4 = vld [vmem:[%s0] ss:$0 sm:$0xff]
  %5 = vst [vmem:[%s1] sm:$0xff] %v4
  %s6 = scalar_lea.vmem %s1, 8
  %7 = vst [vmem:[%s6] sm:$0xff] %v4

// kernel: tile.14
$region0: #{tile.14}
  %s0 = inlined_call_operand.vmem [shape: f32[16,8], index: 0, kind: input, shape index: {}]
  %s1 = inlined_call_operand.vmem [shape: f32[128], index: 1, kind: output, shape index: {}]
  $region1: #{tile.14} parent=0
    #allocation0 [shape = 'u8[4096]{0}', space=vmem, size = 0x1000, scoped, tag = 'scoped mem for output reshape']
    %v2 = vld [vmem:[%s0] sm:$0x1]
    %vm3 = vcmask 64512
    %4 = vst.msk [vmem:[#allocation0] sm:$0x1] %vm3, %v2
    %s5 = scalar_lea.vmem %s0, 15
    %v6 = vld [vmem:[%s5] sm:$0x1]
    %7 = vrot.lane.b32.xlu0 %v6, 120
    %v8 = vpop.permute.xlu0 %7
    %vm9 = vcmask 1048512
    %10 = vst.msk [vmem:[#allocation0] sm:$0x1] %vm9, %v8
    %s11 = scalar_lea.vmem %s0, 14
    %v12 = vld [vmem:[%s11] sm:$0x1]
    %13 = vrot.lane.b32.xlu0 %v12, 112
    %v14 = vpop.permute.xlu0 %13
    %vm15 = vcmask 982912
    %16 = vst.msk [vmem:[#allocation0] sm:$0x1] %vm15, %v14
    %s17 = scalar_lea.vmem %s0, 13
    %v18 = vld [vmem:[%s17] sm:$0x1]
    %19 = vrot.lane.b32.xlu0 %v18, 104
    %v20 = vpop.permute.xlu0 %19
    %vm21 = vcmask 917312
    %22 = vst.msk [vmem:[#allocation0] sm:$0x1] %vm21, %v20
    %s23 = scalar_lea.vmem %s0, 12
    %v24 = vld [vmem:[%s23] sm:$0x1]
    %25 = vrot.lane.b32.xlu0 %v24, 96
    %v26 = vpop.permute.xlu0 %25
    %vm27 = vcmask 851712
    %28 = vst.msk [vmem:[#allocation0] sm:$0x1] %vm27, %v26
    %s29 = scalar_lea.vmem %s0, 11
    %v30 = vld [vmem:[%s29] sm:$0x1]
    %31 = vrot.lane.b32.xlu0 %v30, 88
    %v32 = vpop.permute.xlu0 %31
    %vm33 = vcmask 786112
    %34 = vst.msk [vmem:[#allocation0] sm:$0x1] %vm33, %v32
    %s35 = scalar_lea.vmem %s0, 10
    %v36 = vld [vmem:[%s35] sm:$0x1]
    %37 = vrot.lane.b32.xlu0 %v36, 80
    %v38 = vpop.permute.xlu0 %37
    %vm39 = vcmask 720512
    %40 = vst.msk [vmem:[#allocation0] sm:$0x1] %vm39, %v38
    %s41 = scalar_lea.vmem %s0, 9
    %v42 = vld [vmem:[%s41] sm:$0x1]
    %43 = vrot.lane.b32.xlu0 %v42, 72
    %v44 = vpop.permute.xlu0 %43
    %vm45 = vcmask 654912
    %46 = vst.msk [vmem:[#allocation0] sm:$0x1] %vm45, %v44
    %s47 = scalar_lea.vmem %s0, 8
    %v48 = vld [vmem:[%s47] sm:$0x1]
    %49 = vrot.lane.b32.xlu0 %v48, 64
    %v50 = vpop.permute.xlu0 %49
    %vm51 = vcmask 589312
    %52 = vst.msk [vmem:[#allocation0] sm:$0x1] %vm51, %v50
    %s53 = scalar_lea.vmem %s0, 7
    %v54 = vld [vmem:[%s53] sm:$0x1]
    %55 = vrot.lane.b32.xlu0 %v54, 56
    %v56 = vpop.permute.xlu0 %55
    %vm57 = vcmask 523712
    %58 = vst.msk [vmem:[#allocation0] sm:$0x1] %vm57, %v56
    %s59 = scalar_lea.vmem %s0, 6
    %v60 = vld [vmem:[%s59] sm:$0x1]
    %61 = vrot.lane.b32.xlu0 %v60, 48
    %v62 = vpop.permute.xlu0 %61
    %vm63 = vcmask 458112
    %64 = vst.msk [vmem:[#allocation0] sm:$0x1] %vm63, %v62
    %s65 = scalar_lea.vmem %s0, 5
    %v66 = vld [vmem:[%s65] sm:$0x1]
    %67 = vrot.lane.b32.xlu0 %v66, 40
    %v68 = vpop.permute.xlu0 %67
    %vm69 = vcmask 392512
    %70 = vst.msk [vmem:[#allocation0] sm:$0x1] %vm69, %v68
    %s71 = scalar_lea.vmem %s0, 4
    %v72 = vld [vmem:[%s71] sm:$0x1]
    %73 = vrot.lane.b32.xlu0 %v72, 32
    %v74 = vpop.permute.xlu0 %73
    %vm75 = vcmask 326912
    %76 = vst.msk [vmem:[#allocation0] sm:$0x1] %vm75, %v74
    %s77 = scalar_lea.vmem %s0, 3
    %v78 = vld [vmem:[%s77] sm:$0x1]
    %79 = vrot.lane.b32.xlu0 %v78, 24
    %v80 = vpop.permute.xlu0 %79
    %vm81 = vcmask 261312
    %82 = vst.msk [vmem:[#allocation0] sm:$0x1] %vm81, %v80
    %s83 = scalar_lea.vmem %s0, 2
    %v84 = vld [vmem:[%s83] sm:$0x1]
    %85 = vrot.lane.b32.xlu0 %v84, 16
    %v86 = vpop.permute.xlu0 %85
    %vm87 = vcmask 195712
    %88 = vst.msk [vmem:[#allocation0] sm:$0x1] %vm87, %v86
    %s89 = scalar_lea.vmem %s0, 1
    %v90 = vld [vmem:[%s89] sm:$0x1]
    %91 = vrot.lane.b32.xlu0 %v90, 8
    %v92 = vpop.permute.xlu0 %91
    %vm93 = vcmask 130112
    %94 = vst.msk [vmem:[#allocation0] sm:$0x1] %vm93, %v92
    %s96 = sshllo.u32 0, 1
    %v98 = vld [vmem:[#allocation0] sm:%s96]
    %s99 = sshllo.u32 0, 1
    %100 = vst [vmem:[%s1] sm:%s99] %v98

// kernel: tile.19
$region0: #{tile.19}
  %s0 = inlined_call_operand.vmem [shape: f32[16,8], index: 0, kind: input, shape index: {}]
  %s1 = inlined_call_operand.vmem [shape: f32[1,128], index: 1, kind: output, shape index: {}]
  $region1: #{tile.19} parent=0
    #allocation0 [shape = 'u8[4096]{0}', space=vmem, size = 0x1000, scoped, tag = 'scoped mem for output reshape']
    %v2 = vld [vmem:[%s0] sm:$0x1]
    %vm3 = vcmask 64512
    %4 = vst.msk [vmem:[#allocation0] sm:$0x1] %vm3, %v2
    %s5 = scalar_lea.vmem %s0, 15
    %v6 = vld [vmem:[%s5] sm:$0x1]
    %7 = vrot.lane.b32.xlu0 %v6, 120
    %v8 = vpop.permute.xlu0 %7
    %vm9 = vcmask 1048512
    %10 = vst.msk [vmem:[#allocation0] sm:$0x1] %vm9, %v8
    %s11 = scalar_lea.vmem %s0, 14
    %v12 = vld [vmem:[%s11] sm:$0x1]
    %13 = vrot.lane.b32.xlu0 %v12, 112
    %v14 = vpop.permute.xlu0 %13
    %vm15 = vcmask 982912
    %16 = vst.msk [vmem:[#allocation0] sm:$0x1] %vm15, %v14
    %s17 = scalar_lea.vmem %s0, 13
    %v18 = vld [vmem:[%s17] sm:$0x1]
    %19 = vrot.lane.b32.xlu0 %v18, 104
    %v20 = vpop.permute.xlu0 %19
    %vm21 = vcmask 917312
    %22 = vst.msk [vmem:[#allocation0] sm:$0x1] %vm21, %v20
    %s23 = scalar_lea.vmem %s0, 12
    %v24 = vld [vmem:[%s23] sm:$0x1]
    %25 = vrot.lane.b32.xlu0 %v24, 96
    %v26 = vpop.permute.xlu0 %25
    %vm27 = vcmask 851712
    %28 = vst.msk [vmem:[#allocation0] sm:$0x1] %vm27, %v26
    %s29 = scalar_lea.vmem %s0, 11
    %v30 = vld [vmem:[%s29] sm:$0x1]
    %31 = vrot.lane.b32.xlu0 %v30, 88
    %v32 = vpop.permute.xlu0 %31
    %vm33 = vcmask 786112
    %34 = vst.msk [vmem:[#allocation0] sm:$0x1] %vm33, %v32
    %s35 = scalar_lea.vmem %s0, 10
    %v36 = vld [vmem:[%s35] sm:$0x1]
    %37 = vrot.lane.b32.xlu0 %v36, 80
    %v38 = vpop.permute.xlu0 %37
    %vm39 = vcmask 720512
    %40 = vst.msk [vmem:[#allocation0] sm:$0x1] %vm39, %v38
    %s41 = scalar_lea.vmem %s0, 9
    %v42 = vld [vmem:[%s41] sm:$0x1]
    %43 = vrot.lane.b32.xlu0 %v42, 72
    %v44 = vpop.permute.xlu0 %43
    %vm45 = vcmask 654912
    %46 = vst.msk [vmem:[#allocation0] sm:$0x1] %vm45, %v44
    %s47 = scalar_lea.vmem %s0, 8
    %v48 = vld [vmem:[%s47] sm:$0x1]
    %49 = vrot.lane.b32.xlu0 %v48, 64
    %v50 = vpop.permute.xlu0 %49
    %vm51 = vcmask 589312
    %52 = vst.msk [vmem:[#allocation0] sm:$0x1] %vm51, %v50
    %s53 = scalar_lea.vmem %s0, 7
    %v54 = vld [vmem:[%s53] sm:$0x1]
    %55 = vrot.lane.b32.xlu0 %v54, 56
    %v56 = vpop.permute.xlu0 %55
    %vm57 = vcmask 523712
    %58 = vst.msk [vmem:[#allocation0] sm:$0x1] %vm57, %v56
    %s59 = scalar_lea.vmem %s0, 6
    %v60 = vld [vmem:[%s59] sm:$0x1]
    %61 = vrot.lane.b32.xlu0 %v60, 48
    %v62 = vpop.permute.xlu0 %61
    %vm63 = vcmask 458112
    %64 = vst.msk [vmem:[#allocation0] sm:$0x1] %vm63, %v62
    %s65 = scalar_lea.vmem %s0, 5
    %v66 = vld [vmem:[%s65] sm:$0x1]
    %67 = vrot.lane.b32.xlu0 %v66, 40
    %v68 = vpop.permute.xlu0 %67
    %vm69 = vcmask 392512
    %70 = vst.msk [vmem:[#allocation0] sm:$0x1] %vm69, %v68
    %s71 = scalar_lea.vmem %s0, 4
    %v72 = vld [vmem:[%s71] sm:$0x1]
    %73 = vrot.lane.b32.xlu0 %v72, 32
    %v74 = vpop.permute.xlu0 %73
    %vm75 = vcmask 326912
    %76 = vst.msk [vmem:[#allocation0] sm:$0x1] %vm75, %v74
    %s77 = scalar_lea.vmem %s0, 3
    %v78 = vld [vmem:[%s77] sm:$0x1]
    %79 = vrot.lane.b32.xlu0 %v78, 24
    %v80 = vpop.permute.xlu0 %79
    %vm81 = vcmask 261312
    %82 = vst.msk [vmem:[#allocation0] sm:$0x1] %vm81, %v80
    %s83 = scalar_lea.vmem %s0, 2
    %v84 = vld [vmem:[%s83] sm:$0x1]
    %85 = vrot.lane.b32.xlu0 %v84, 16
    %v86 = vpop.permute.xlu0 %85
    %vm87 = vcmask 195712
    %88 = vst.msk [vmem:[#allocation0] sm:$0x1] %vm87, %v86
    %s89 = scalar_lea.vmem %s0, 1
    %v90 = vld [vmem:[%s89] sm:$0x1]
    %91 = vrot.lane.b32.xlu0 %v90, 8
    %v92 = vpop.permute.xlu0 %91
    %vm93 = vcmask 130112
    %94 = vst.msk [vmem:[#allocation0] sm:$0x1] %vm93, %v92
    %s96 = sshllo.u32 0, 1
    %v98 = vld [vmem:[#allocation0] sm:%s96]
    %s99 = sshllo.u32 0, 1
    %100 = vst [vmem:[%s1] sm:%s99] %v98

// kernel: unet_up_pallas.1
$region0: #{unet_up_pallas.1}
  #allocation0 [shape = 'u32[]', space=smem, size = 0x4, offset = 0x4, fixed_abs, tag = 'smem constant byte address 0x4 - core index']
  #allocation1 [shape = 'u32[144,128]{1,0:T(1,128)}', space=vmem, size = 0x12000, scoped, tag = 'internal scratch']
  %s0 = inlined_call_operand.vmem [shape: bf16[36,144], index: 0, kind: input, shape index: {}]
  %s1 = inlined_call_operand.vmem [shape: bf16[3,144,144], index: 1, kind: input, shape index: {}]
  %s2 = inlined_call_operand.vmem [shape: f32[1,144], index: 2, kind: input, shape index: {}]
  %s3 = inlined_call_operand.vmem [shape: bf16[3,144,128], index: 3, kind: input, shape index: {}]
  %s4 = inlined_call_operand.vmem [shape: f32[1,128], index: 4, kind: input, shape index: {}]
  %s5 = inlined_call_operand.vmem [shape: f32[34,1], index: 5, kind: input, shape index: {}]
  %s6 = inlined_call_operand.vmem [shape: f32[2,16,128], index: 6, kind: output, shape index: {}]
  %s7 = sld [smem:[#allocation0]]
  $region34: #{unet_up_pallas.1} parent=0
    _
  %s9 = ssub.s32 1, %s7
  %s10 = scalar_select 0, %s9, %s7
  // Predicated region
  $region2: #{unet_up_pallas.1} parent=0 // pred_check
    _
  $region3: #{unet_up_pallas.1} parent=0 // pred_check_branch
    %12 = sbr.rel (0) target = $region5
  $region4: #{unet_up_pallas.1} parent=0 // pred_region
    _
  $region5: #{unet_up_pallas.1} parent=0 // pred_fallthru
    _
  // Predicated region
  $region6: #{unet_up_pallas.1} parent=0 // pred_check
    _
  $region7: #{unet_up_pallas.1} parent=0 // pred_check_branch
    %14 = sbr.rel (0) target = $region9
  $region8: #{unet_up_pallas.1} parent=0 // pred_region
    _
  $region9: #{unet_up_pallas.1} parent=0 // pred_fallthru
    _
  // Predicated region
  $region10: #{unet_up_pallas.1} parent=0 // pred_check
    _
  $region11: #{unet_up_pallas.1} parent=0 // pred_check_branch
    %16 = sbr.rel (0) target = $region13
  $region12: #{unet_up_pallas.1} parent=0 // pred_region
    _
  $region13: #{unet_up_pallas.1} parent=0 // pred_fallthru
    _
  // Predicated region
  $region14: #{unet_up_pallas.1} parent=0 // pred_check
    _
  $region15: #{unet_up_pallas.1} parent=0 // pred_check_branch
    %18 = sbr.rel (0) target = $region17
  $region16: #{unet_up_pallas.1} parent=0 // pred_region
    _
  $region17: #{unet_up_pallas.1} parent=0 // pred_fallthru
    _
  // Predicated region
  $region18: #{unet_up_pallas.1} parent=0 // pred_check
    _
  $region19: #{unet_up_pallas.1} parent=0 // pred_check_branch
    %20 = sbr.rel (0) target = $region21
  $region20: #{unet_up_pallas.1} parent=0 // pred_region
    _
  $region21: #{unet_up_pallas.1} parent=0 // pred_fallthru
    _
  // Predicated region
  $region22: #{unet_up_pallas.1} parent=0 // pred_check
    _
  $region23: #{unet_up_pallas.1} parent=0 // pred_check_branch
    %22 = sbr.rel (0) target = $region25
  $region24: #{unet_up_pallas.1} parent=0 // pred_region
    _
  $region25: #{unet_up_pallas.1} parent=0 // pred_fallthru
    _
  %v24 = vld [vmem:[%s0] sm:$0xff]
  %v25 = vld [vmem:[%s0 + $0x8] sm:$0xff]
  %v26 = vld [vmem:[%s0 + $0x10] sm:$0xff]
  %v27 = vld [vmem:[%s0 + $0x18] sm:$0xff]
  %v28 = vld [vmem:[%s0 + $0x20] sm:$0x33]
  %v29 = vld [vmem:[%s1] sm:$0xff]
  %v30 = vld [vmem:[%s1 + $0x8] sm:$0xff]
  %v31 = vld [vmem:[%s1 + $0x10] sm:$0xff]
  %v32 = vld [vmem:[%s1 + $0x18] sm:$0xff]
  %v33 = vld [vmem:[%s1 + $0x20] sm:$0xff]
  %v34 = vld [vmem:[%s1 + $0x28] sm:$0xff]
  %v35 = vld [vmem:[%s1 + $0x30] sm:$0xff]
  %v36 = vld [vmem:[%s1 + $0x38] sm:$0xff]
  %v37 = vld [vmem:[%s1 + $0x40] sm:$0xff]
  %v38 = vld [vmem:[%s1 + $0x48] sm:$0xff]
  %v39 = vld [vmem:[%s1 + $0x50] sm:$0xff]
  %v40 = vld [vmem:[%s1 + $0x58] sm:$0xff]
  %v41 = vld [vmem:[%s1 + $0x60] sm:$0xff]
  %v42 = vld [vmem:[%s1 + $0x68] sm:$0xff]
  %v43 = vld [vmem:[%s1 + $0x70] sm:$0xff]
  %v44 = vld [vmem:[%s1 + $0x78] sm:$0xff]
  %v45 = vld [vmem:[%s1 + $0x80] sm:$0xff]
  %v46 = vld [vmem:[%s1 + $0x88] sm:$0xff]
  %s47 = scalar_lea.vmem %s1, 144
  %v48 = vld [vmem:[%s47] sm:$0xff]
  %v49 = vld [vmem:[%s47 + $0x8] sm:$0xff]
  %v50 = vld [vmem:[%s47 + $0x10] sm:$0xff]
  %v51 = vld [vmem:[%s47 + $0x18] sm:$0xff]
  %v52 = vld [vmem:[%s47 + $0x20] sm:$0xff]
  %v53 = vld [vmem:[%s47 + $0x28] sm:$0xff]
  %v54 = vld [vmem:[%s47 + $0x30] sm:$0xff]
  %v55 = vld [vmem:[%s47 + $0x38] sm:$0xff]
  %v56 = vld [vmem:[%s47 + $0x40] sm:$0xff]
  %v57 = vld [vmem:[%s47 + $0x48] sm:$0xff]
  %v58 = vld [vmem:[%s47 + $0x50] sm:$0xff]
  %v59 = vld [vmem:[%s47 + $0x58] sm:$0xff]
  %v60 = vld [vmem:[%s47 + $0x60] sm:$0xff]
  %v61 = vld [vmem:[%s47 + $0x68] sm:$0xff]
  %v62 = vld [vmem:[%s47 + $0x70] sm:$0xff]
  %v63 = vld [vmem:[%s47 + $0x78] sm:$0xff]
  %v64 = vld [vmem:[%s47 + $0x80] sm:$0xff]
  %v65 = vld [vmem:[%s47 + $0x88] sm:$0xff]
  %v71 = vunpack.c.l.b16 %v24
  %v72 = vunpack.c.h.b16 %v24
  %v73 = vunpack.c.l.b16 %v25
  %v74 = vunpack.c.h.b16 %v25
  %v75 = vunpack.c.l.b16 %v26
  %v76 = vunpack.c.h.b16 %v26
  %v77 = vunpack.c.l.b16 %v27
  %v78 = vunpack.c.h.b16 %v27
  %v79 = vunpack.c.l.b16 %v28
  %v80 = vunpack.c.h.b16 %v28
  %v81 = vpack.c.b16 %v73, %v71
  %v82 = vpack.c.b16 %v74, %v72
  %v83 = vpack.c.b16 %v77, %v75
  %v84 = vpack.c.b16 %v78, %v76
  %v85 = vpack.c.b16 %v79, %v79
  %v86 = vpack.c.b16 %v80, %v80
  %vm87 = vsmask.f32 7424
  %v89 = vshrl.u32 %v81, 16
  %v91 = vshll.u32 %v81, 16
  %v93 = vrot.slane %v91, 1
  %v94 = vor.u32 %v89, %v93
  %v96 = vshll.u32 %v83, 16
  %v98 = vrot.slane %v96, 1
  %v99 = vsel %vm87, %v94, %v98
  %v101 = vshrl.u32 %v82, 16
  %v103 = vshll.u32 %v82, 16
  %v105 = vrot.slane %v103, 1
  %v106 = vor.u32 %v101, %v105
  %v108 = vshll.u32 %v84, 16
  %v110 = vrot.slane %v108, 1
  %v111 = vsel %vm87, %v106, %v110
  %v112 = vshrl.u32 %v83, 16
  %v114 = vor.u32 %v112, %v98
  %v116 = vshll.u32 %v85, 16
  %v118 = vrot.slane %v116, 1
  %v119 = vsel %vm87, %v114, %v118
  %v120 = vshrl.u32 %v84, 16
  %v122 = vor.u32 %v120, %v110
  %v124 = vshll.u32 %v86, 16
  %v126 = vrot.slane %v124, 1
  %v127 = vsel %vm87, %v122, %v126
  %v128 = vshrl.u32 %v85, 16
  %v130 = vor.u32 %v128, %v118
  %v131 = vshrl.u32 %v86, 16
  %v133 = vor.u32 %v131, %v126
  %v155 = vunpack.c.l.b16 %v48
  %v156 = vunpack.c.h.b16 %v48
  %v157 = vunpack.c.l.b16 %v49
  %v158 = vunpack.c.h.b16 %v49
  %v159 = vunpack.c.l.b16 %v50
  %v160 = vunpack.c.h.b16 %v50
  %v161 = vunpack.c.l.b16 %v51
  %v162 = vunpack.c.h.b16 %v51
  %v163 = vunpack.c.l.b16 %v52
  %v164 = vunpack.c.h.b16 %v52
  %v165 = vunpack.c.l.b16 %v53
  %v166 = vunpack.c.h.b16 %v53
  %v167 = vunpack.c.l.b16 %v54
  %v168 = vunpack.c.h.b16 %v54
  %v169 = vunpack.c.l.b16 %v55
  %v170 = vunpack.c.h.b16 %v55
  %v171 = vunpack.c.l.b16 %v56
  %v172 = vunpack.c.h.b16 %v56
  %v173 = vunpack.c.l.b16 %v57
  %v174 = vunpack.c.h.b16 %v57
  %v175 = vunpack.c.l.b16 %v58
  %v176 = vunpack.c.h.b16 %v58
  %v177 = vunpack.c.l.b16 %v59
  %v178 = vunpack.c.h.b16 %v59
  %v179 = vunpack.c.l.b16 %v60
  %v180 = vunpack.c.h.b16 %v60
  %v181 = vunpack.c.l.b16 %v61
  %v182 = vunpack.c.h.b16 %v61
  %v183 = vunpack.c.l.b16 %v62
  %v184 = vunpack.c.h.b16 %v62
  %v185 = vunpack.c.l.b16 %v63
  %v186 = vunpack.c.h.b16 %v63
  %v187 = vunpack.c.l.b16 %v64
  %v188 = vunpack.c.h.b16 %v64
  %v189 = vunpack.c.l.b16 %v65
  %v190 = vunpack.c.h.b16 %v65
  %v191 = vpack.c.b16 %v157, %v155
  %v192 = vpack.c.b16 %v158, %v156
  %v193 = vpack.c.b16 %v161, %v159
  %v194 = vpack.c.b16 %v162, %v160
  %v195 = vpack.c.b16 %v165, %v163
  %v196 = vpack.c.b16 %v166, %v164
  %v197 = vpack.c.b16 %v169, %v167
  %v198 = vpack.c.b16 %v170, %v168
  %v199 = vpack.c.b16 %v173, %v171
  %v200 = vpack.c.b16 %v174, %v172
  %v201 = vpack.c.b16 %v177, %v175
  %v202 = vpack.c.b16 %v178, %v176
  %v203 = vpack.c.b16 %v181, %v179
  %v204 = vpack.c.b16 %v182, %v180
  %v205 = vpack.c.b16 %v185, %v183
  %v206 = vpack.c.b16 %v186, %v184
  %v207 = vpack.c.b16 %v189, %v187
  %v208 = vpack.c.b16 %v190, %v188
  %vm227 = vcmask 130048
  %v229 = vsel %vm227, %v111, 0
  %v232 = vsel %vm227, %v127, 0
  %v235 = vsel %vm227, %v133, 0
  %237 = vmatprep.subr.bf16.mxu0 %v192
  %238 = vmatpush1.bf16.msra.mxu0 %v191
  %239 = vmatprep.subr.bf16.mxu0 %v194
  %240 = vmatpush1.bf16.msra.mxu0 %v193
  %241 = vmatprep.subr.bf16.mxu0 %v196
  %242 = vmatpush1.bf16.msra.mxu0 %v195
  %243 = vmatprep.subr.bf16.mxu0 %v198
  %244 = vmatpush1.bf16.msra.mxu0 %v197
  %245 = vmatprep.subr.bf16.mxu0 %v200
  %246 = vmatpush1.bf16.msra.mxu0 %v199
  %247 = vmatprep.subr.bf16.mxu0 %v202
  %248 = vmatpush1.bf16.msra.mxu0 %v201
  %249 = vmatprep.subr.bf16.mxu0 %v204
  %250 = vmatpush1.bf16.msra.mxu0 %v203
  %251 = vmatprep.subr.bf16.mxu0 %v206
  %252 = vmatpush1.bf16.msra.mxu0 %v205
  %253 = vmatprep.subr.bf16.mxu0 %v208
  %254 = vmatpush1.bf16.msra.mxu0 %v207
  %255 = vmatprep.subr.bf16.mxu0 0
  %256 = vmatpush1.bf16.msra.mxu0 0
  %257 = vmatprep.subr.bf16.mxu0 0
  %258 = vmatpush1.bf16.msra.mxu0 0
  %259 = vmatprep.subr.bf16.mxu0 0
  %260 = vmatpush1.bf16.msra.mxu0 0
  %261 = vmatprep.subr.bf16.mxu0 0
  %262 = vmatpush1.bf16.msra.mxu0 0
  %263 = vmatprep.subr.bf16.mxu0 0
  %264 = vmatpush1.bf16.msra.mxu0 0
  %265 = vmatprep.subr.bf16.mxu0 0
  %266 = vmatpush1.bf16.msra.mxu0 0
  %267 = vmatprep.subr.bf16.mxu0 0
  %268 = vmatpush1.bf16.msra.mxu0 0
  %269 = vmatprep.mubr.bf16.mxu0 %v229
  %270 = vmatmul.mubr.bf16.gmra.mrb[0].mxu0 %v99
  %v271 = vpop.f32.mrb[0].mxu0
  %v272 = vadd.f32 0.0, %v271
  %v273 = vpop.f32.mrb[0].mxu0
  %v274 = vadd.f32 0.0, %v273
  %v275 = vpop.f32.mrb[0].mxu0
  %v276 = vadd.f32 0.0, %v275
  %v277 = vpop.f32.mrb[0].mxu0
  %v278 = vadd.f32 0.0, %v277
  %279 = vmatprep.mubr.bf16.mxu0 %v232
  %280 = vmatmul.mubr.bf16.gmra.mrb[0].mxu0 %v119
  %v281 = vpop.f32.mrb[0].mxu0
  %v282 = vadd.f32 0.0, %v281
  %v283 = vpop.f32.mrb[0].mxu0
  %v284 = vadd.f32 0.0, %v283
  %v285 = vpop.f32.mrb[0].mxu0
  %v286 = vadd.f32 0.0, %v285
  %v287 = vpop.f32.mrb[0].mxu0
  %v288 = vadd.f32 0.0, %v287
  %289 = vmatprep.mubr.bf16.mxu0 %v235
  %290 = vmatmul.mubr.bf16.gmra.mrb[0].mxu0 %v130
  %v291 = vpop.f32.mrb[0].mxu0
  %v292 = vadd.f32 0.0, %v291
  %v293 = vpop.f32.mrb[0].mxu0
  %v294 = vadd.f32 0.0, %v293
  %v295 = vpop.f32.mrb[0].mxu0
  %v296 = vpop.f32.mrb[0].mxu0
  %297 = vdwg.mxu0
  %v319 = vunpack.c.l.b16 %v29
  %v320 = vunpack.c.h.b16 %v29
  %v321 = vunpack.c.l.b16 %v30
  %v322 = vunpack.c.h.b16 %v30
  %v323 = vunpack.c.l.b16 %v31
  %v324 = vunpack.c.h.b16 %v31
  %v325 = vunpack.c.l.b16 %v32
  %v326 = vunpack.c.h.b16 %v32
  %v327 = vunpack.c.l.b16 %v33
  %v328 = vunpack.c.h.b16 %v33
  %v329 = vunpack.c.l.b16 %v34
  %v330 = vunpack.c.h.b16 %v34
  %v331 = vunpack.c.l.b16 %v35
  %v332 = vunpack.c.h.b16 %v35
  %v333 = vunpack.c.l.b16 %v36
  %v334 = vunpack.c.h.b16 %v36
  %v335 = vunpack.c.l.b16 %v37
  %v336 = vunpack.c.h.b16 %v37
  %v337 = vunpack.c.l.b16 %v38
  %v338 = vunpack.c.h.b16 %v38
  %v339 = vunpack.c.l.b16 %v39
  %v340 = vunpack.c.h.b16 %v39
  %v341 = vunpack.c.l.b16 %v40
  %v342 = vunpack.c.h.b16 %v40
  %v343 = vunpack.c.l.b16 %v41
  %v344 = vunpack.c.h.b16 %v41
  %v345 = vunpack.c.l.b16 %v42
  %v346 = vunpack.c.h.b16 %v42
  %v347 = vunpack.c.l.b16 %v43
  %v348 = vunpack.c.h.b16 %v43
  %v349 = vunpack.c.l.b16 %v44
  %v350 = vunpack.c.h.b16 %v44
  %v351 = vunpack.c.l.b16 %v45
  %v352 = vunpack.c.h.b16 %v45
  %v353 = vunpack.c.l.b16 %v46
  %v354 = vunpack.c.h.b16 %v46
  %v355 = vpack.c.b16 %v321, %v319
  %v356 = vpack.c.b16 %v322, %v320
  %v357 = vpack.c.b16 %v325, %v323
  %v358 = vpack.c.b16 %v326, %v324
  %v359 = vpack.c.b16 %v329, %v327
  %v360 = vpack.c.b16 %v330, %v328
  %v361 = vpack.c.b16 %v333, %v331
  %v362 = vpack.c.b16 %v334, %v332
  %v363 = vpack.c.b16 %v337, %v335
  %v364 = vpack.c.b16 %v338, %v336
  %v365 = vpack.c.b16 %v341, %v339
  %v366 = vpack.c.b16 %v342, %v340
  %v367 = vpack.c.b16 %v345, %v343
  %v368 = vpack.c.b16 %v346, %v344
  %v369 = vpack.c.b16 %v349, %v347
  %v370 = vpack.c.b16 %v350, %v348
  %v371 = vpack.c.b16 %v353, %v351
  %v372 = vpack.c.b16 %v354, %v352
  %v391 = vsel %vm227, %v82, 0
  %v393 = vsel %vm227, %v84, 0
  %v395 = vsel %vm227, %v86, 0
  %397 = vmatprep.subr.bf16.mxu0 %v356
  %398 = vmatpush1.bf16.msra.mxu0 %v355
  %399 = vmatprep.subr.bf16.mxu0 %v358
  %400 = vmatpush1.bf16.msra.mxu0 %v357
  %401 = vmatprep.subr.bf16.mxu0 %v360
  %402 = vmatpush1.bf16.msra.mxu0 %v359
  %403 = vmatprep.subr.bf16.mxu0 %v362
  %404 = vmatpush1.bf16.msra.mxu0 %v361
  %405 = vmatprep.subr.bf16.mxu0 %v364
  %406 = vmatpush1.bf16.msra.mxu0 %v363
  %407 = vmatprep.subr.bf16.mxu0 %v366
  %408 = vmatpush1.bf16.msra.mxu0 %v365
  %409 = vmatprep.subr.bf16.mxu0 %v368
  %410 = vmatpush1.bf16.msra.mxu0 %v367
  %411 = vmatprep.subr.bf16.mxu0 %v370
  %412 = vmatpush1.bf16.msra.mxu0 %v369
  %413 = vmatprep.subr.bf16.mxu0 %v372
  %414 = vmatpush1.bf16.msra.mxu0 %v371
  %415 = vmatprep.subr.bf16.mxu0 0
  %416 = vmatpush1.bf16.msra.mxu0 0
  %417 = vmatprep.subr.bf16.mxu0 0
  %418 = vmatpush1.bf16.msra.mxu0 0
  %419 = vmatprep.subr.bf16.mxu0 0
  %420 = vmatpush1.bf16.msra.mxu0 0
  %421 = vmatprep.subr.bf16.mxu0 0
  %422 = vmatpush1.bf16.msra.mxu0 0
  %423 = vmatprep.subr.bf16.mxu0 0
  %424 = vmatpush1.bf16.msra.mxu0 0
  %425 = vmatprep.subr.bf16.mxu0 0
  %426 = vmatpush1.bf16.msra.mxu0 0
  %427 = vmatprep.subr.bf16.mxu0 0
  %428 = vmatpush1.bf16.msra.mxu0 0
  %429 = vmatprep.mubr.bf16.mxu0 %v391
  %430 = vmatmul.mubr.bf16.gmra.mrb[0].mxu0 %v81
  %v431 = vpop.f32.mrb[0].mxu0
  %v432 = vadd.f32 %v272, %v431
  %v433 = vpop.f32.mrb[0].mxu0
  %v434 = vadd.f32 %v274, %v433
  %v435 = vpop.f32.mrb[0].mxu0
  %v436 = vadd.f32 %v276, %v435
  %v437 = vpop.f32.mrb[0].mxu0
  %v438 = vadd.f32 %v278, %v437
  %439 = vmatprep.mubr.bf16.mxu0 %v393
  %440 = vmatmul.mubr.bf16.gmra.mrb[0].mxu0 %v83
  %v441 = vpop.f32.mrb[0].mxu0
  %v442 = vadd.f32 %v282, %v441
  %v443 = vpop.f32.mrb[0].mxu0
  %v444 = vadd.f32 %v284, %v443
  %v445 = vpop.f32.mrb[0].mxu0
  %v446 = vadd.f32 %v286, %v445
  %v447 = vpop.f32.mrb[0].mxu0
  %v448 = vadd.f32 %v288, %v447
  %449 = vmatprep.mubr.bf16.mxu0 %v395
  %450 = vmatmul.mubr.bf16.gmra.mrb[0].mxu0 %v85
  %v451 = vpop.f32.mrb[0].mxu0
  %v452 = vadd.f32 %v292, %v451
  %v453 = vpop.f32.mrb[0].mxu0
  %v454 = vadd.f32 %v294, %v453
  %v455 = vpop.f32.mrb[0].mxu0
  %v456 = vpop.f32.mrb[0].mxu0
  %457 = vdwg.mxu0
  %s458 = scalar_lea.vmem %s1, 288
  %v459 = vld [vmem:[%s458] sm:$0xff]
  %v460 = vld [vmem:[%s458 + $0x8] sm:$0xff]
  %v461 = vld [vmem:[%s458 + $0x10] sm:$0xff]
  %v462 = vld [vmem:[%s458 + $0x18] sm:$0xff]
  %v463 = vld [vmem:[%s458 + $0x20] sm:$0xff]
  %v464 = vld [vmem:[%s458 + $0x28] sm:$0xff]
  %v465 = vld [vmem:[%s458 + $0x30] sm:$0xff]
  %v466 = vld [vmem:[%s458 + $0x38] sm:$0xff]
  %v467 = vld [vmem:[%s458 + $0x40] sm:$0xff]
  %v468 = vld [vmem:[%s458 + $0x48] sm:$0xff]
  %v469 = vld [vmem:[%s458 + $0x50] sm:$0xff]
  %v470 = vld [vmem:[%s458 + $0x58] sm:$0xff]
  %v471 = vld [vmem:[%s458 + $0x60] sm:$0xff]
  %v472 = vld [vmem:[%s458 + $0x68] sm:$0xff]
  %v473 = vld [vmem:[%s458 + $0x70] sm:$0xff]
  %v474 = vld [vmem:[%s458 + $0x78] sm:$0xff]
  %v475 = vld [vmem:[%s458 + $0x80] sm:$0xff]
  %v476 = vld [vmem:[%s458 + $0x88] sm:$0xff]
  %vm477 = vcmask 1046528
  %v478 = vrot.slane %v81, 1
  %v479 = vrot.slane %v83, 1
  %v480 = vsel %vm477, %v478, %v479
  %v481 = vrot.slane %v82, 1
  %v482 = vrot.slane %v84, 1
  %v483 = vsel %vm477, %v481, %v482
  %v484 = vrot.slane %v85, 1
  %v485 = vsel %vm477, %v479, %v484
  %v486 = vrot.slane %v86, 1
  %v487 = vsel %vm477, %v482, %v486
  %v509 = vunpack.c.l.b16 %v459
  %v510 = vunpack.c.h.b16 %v459
  %v511 = vunpack.c.l.b16 %v460
  %v512 = vunpack.c.h.b16 %v460
  %v513 = vunpack.c.l.b16 %v461
  %v514 = vunpack.c.h.b16 %v461
  %v515 = vunpack.c.l.b16 %v462
  %v516 = vunpack.c.h.b16 %v462
  %v517 = vunpack.c.l.b16 %v463
  %v518 = vunpack.c.h.b16 %v463
  %v519 = vunpack.c.l.b16 %v464
  %v520 = vunpack.c.h.b16 %v464
  %v521 = vunpack.c.l.b16 %v465
  %v522 = vunpack.c.h.b16 %v465
  %v523 = vunpack.c.l.b16 %v466
  %v524 = vunpack.c.h.b16 %v466
  %v525 = vunpack.c.l.b16 %v467
  %v526 = vunpack.c.h.b16 %v467
  %v527 = vunpack.c.l.b16 %v468
  %v528 = vunpack.c.h.b16 %v468
  %v529 = vunpack.c.l.b16 %v469
  %v530 = vunpack.c.h.b16 %v469
  %v531 = vunpack.c.l.b16 %v470
  %v532 = vunpack.c.h.b16 %v470
  %v533 = vunpack.c.l.b16 %v471
  %v534 = vunpack.c.h.b16 %v471
  %v535 = vunpack.c.l.b16 %v472
  %v536 = vunpack.c.h.b16 %v472
  %v537 = vunpack.c.l.b16 %v473
  %v538 = vunpack.c.h.b16 %v473
  %v539 = vunpack.c.l.b16 %v474
  %v540 = vunpack.c.h.b16 %v474
  %v541 = vunpack.c.l.b16 %v475
  %v542 = vunpack.c.h.b16 %v475
  %v543 = vunpack.c.l.b16 %v476
  %v544 = vunpack.c.h.b16 %v476
  %v545 = vpack.c.b16 %v511, %v509
  %v546 = vpack.c.b16 %v512, %v510
  %v547 = vpack.c.b16 %v515, %v513
  %v548 = vpack.c.b16 %v516, %v514
  %v549 = vpack.c.b16 %v519, %v517
  %v550 = vpack.c.b16 %v520, %v518
  %v551 = vpack.c.b16 %v523, %v521
  %v552 = vpack.c.b16 %v524, %v522
  %v553 = vpack.c.b16 %v527, %v525
  %v554 = vpack.c.b16 %v528, %v526
  %v555 = vpack.c.b16 %v531, %v529
  %v556 = vpack.c.b16 %v532, %v530
  %v557 = vpack.c.b16 %v535, %v533
  %v558 = vpack.c.b16 %v536, %v534
  %v559 = vpack.c.b16 %v539, %v537
  %v560 = vpack.c.b16 %v540, %v538
  %v561 = vpack.c.b16 %v543, %v541
  %v562 = vpack.c.b16 %v544, %v542
  %v582 = vsel %vm227, %v483, 0
  %v585 = vsel %vm227, %v487, 0
  %v588 = vsel %vm227, %v486, 0
  %590 = vmatprep.subr.bf16.mxu0 %v546
  %591 = vmatpush1.bf16.msra.mxu0 %v545
  %592 = vmatprep.subr.bf16.mxu0 %v548
  %593 = vmatpush1.bf16.msra.mxu0 %v547
  %594 = vmatprep.subr.bf16.mxu0 %v550
  %595 = vmatpush1.bf16.msra.mxu0 %v549
  %596 = vmatprep.subr.bf16.mxu0 %v552
  %597 = vmatpush1.bf16.msra.mxu0 %v551
  %598 = vmatprep.subr.bf16.mxu0 %v554
  %599 = vmatpush1.bf16.msra.mxu0 %v553
  %600 = vmatprep.subr.bf16.mxu0 %v556
  %601 = vmatpush1.bf16.msra.mxu0 %v555
  %602 = vmatprep.subr.bf16.mxu0 %v558
  %603 = vmatpush1.bf16.msra.mxu0 %v557
  %604 = vmatprep.subr.bf16.mxu0 %v560
  %605 = vmatpush1.bf16.msra.mxu0 %v559
  %606 = vmatprep.subr.bf16.mxu0 %v562
  %607 = vmatpush1.bf16.msra.mxu0 %v561
  %608 = vmatprep.subr.bf16.mxu0 0
  %609 = vmatpush1.bf16.msra.mxu0 0
  %610 = vmatprep.subr.bf16.mxu0 0
  %611 = vmatpush1.bf16.msra.mxu0 0
  %612 = vmatprep.subr.bf16.mxu0 0
  %613 = vmatpush1.bf16.msra.mxu0 0
  %614 = vmatprep.subr.bf16.mxu0 0
  %615 = vmatpush1.bf16.msra.mxu0 0
  %616 = vmatprep.subr.bf16.mxu0 0
  %617 = vmatpush1.bf16.msra.mxu0 0
  %618 = vmatprep.subr.bf16.mxu0 0
  %619 = vmatpush1.bf16.msra.mxu0 0
  %620 = vmatprep.subr.bf16.mxu0 0
  %621 = vmatpush1.bf16.msra.mxu0 0
  %622 = vmatprep.mubr.bf16.mxu0 %v582
  %623 = vmatmul.mubr.bf16.gmra.mrb[0].mxu0 %v480
  %v624 = vpop.f32.mrb[0].mxu0
  %v625 = vadd.f32 0.0, %v624
  %v626 = vpop.f32.mrb[0].mxu0
  %v627 = vadd.f32 0.0, %v626
  %v628 = vpop.f32.mrb[0].mxu0
  %v629 = vadd.f32 0.0, %v628
  %v630 = vpop.f32.mrb[0].mxu0
  %v631 = vadd.f32 0.0, %v630
  %632 = vmatprep.mubr.bf16.mxu0 %v585
  %633 = vmatmul.mubr.bf16.gmra.mrb[0].mxu0 %v485
  %v634 = vpop.f32.mrb[0].mxu0
  %v635 = vadd.f32 0.0, %v634
  %v636 = vpop.f32.mrb[0].mxu0
  %v637 = vadd.f32 0.0, %v636
  %v638 = vpop.f32.mrb[0].mxu0
  %v639 = vadd.f32 0.0, %v638
  %v640 = vpop.f32.mrb[0].mxu0
  %v641 = vadd.f32 0.0, %v640
  %642 = vmatprep.mubr.bf16.mxu0 %v588
  %643 = vmatmul.mubr.bf16.gmra.mrb[0].mxu0 %v484
  %v644 = vpop.f32.mrb[0].mxu0
  %v645 = vadd.f32 0.0, %v644
  %v646 = vpop.f32.mrb[0].mxu0
  %v647 = vadd.f32 0.0, %v646
  %v648 = vpop.f32.mrb[0].mxu0
  %v649 = vpop.f32.mrb[0].mxu0
  %650 = vdwg.mxu0
  %v651 = vadd.f32 %v432, %v625
  %v652 = vadd.f32 %v434, %v627
  %v653 = vadd.f32 %v436, %v629
  %v654 = vadd.f32 %v438, %v631
  %v655 = vadd.f32 %v442, %v635
  %v656 = vadd.f32 %v444, %v637
  %v657 = vadd.f32 %v446, %v639
  %v658 = vadd.f32 %v448, %v641
  %v659 = vadd.f32 %v452, %v645
  %v660 = vadd.f32 %v454, %v647
  %v661 = vld [vmem:[%s2] sm:$0x3]
  %v663 = vlaneseq
  %v664 = vshrl.u32 %v663, 7
  %v665 = vsub.s32 0, %v664
  %v666 = vrot.slane %v661, %v665
  %v667 = vlaneseq
  %v668 = vshrl.u32 %v667, 7
  %v669 = vsub.s32 1, %v668
  %v670 = vrot.slane %v661, %v669
  %v673 = vadd.f32 %v651, %v666
  %v674 = vadd.f32 %v652, %v670
  %v675 = vadd.f32 %v653, %v666
  %v676 = vadd.f32 %v654, %v670
  %v677 = vadd.f32 %v655, %v666
  %v678 = vadd.f32 %v656, %v670
  %v679 = vadd.f32 %v657, %v666
  %v680 = vadd.f32 %v658, %v670
  %v681 = vadd.f32 %v659, %v666
  %v682 = vadd.f32 %v660, %v670
  %v683 = vld [vmem:[%s5] sm:$0xff]
  %v684 = vld [vmem:[%s5 + $0x8] sm:$0xff]
  %v685 = vld [vmem:[%s5 + $0x10] sm:$0xff]
  %v686 = vld [vmem:[%s5 + $0x18] sm:$0xff]
  %v687 = vld [vmem:[%s5 + $0x20] sm:$0x3]
  %689 = vset.pattern.permute.xlu0 0
  %690 = vperm.xlu0 %689, %v683
  %v691 = vpop.permute.xlu0 %690
  %694 = vset.pattern.permute.xlu0 0
  %695 = vperm.xlu0 %694, %v684
  %v696 = vpop.permute.xlu0 %695
  %699 = vset.pattern.permute.xlu0 0
  %700 = vperm.xlu0 %699, %v685
  %v701 = vpop.permute.xlu0 %700
  %704 = vset.pattern.permute.xlu0 0
  %705 = vperm.xlu0 %704, %v686
  %v706 = vpop.permute.xlu0 %705
  %709 = vset.pattern.permute.xlu0 0
  %710 = vperm.xlu0 %709, %v687
  %v711 = vpop.permute.xlu0 %710
  %v713 = vmul.f32 %v673, %v691
  %v714 = vmul.f32 %v674, %v691
  %v715 = vmul.f32 %v675, %v696
  %v716 = vmul.f32 %v676, %v696
  %v717 = vmul.f32 %v677, %v701
  %v718 = vmul.f32 %v678, %v701
  %v719 = vmul.f32 %v679, %v706
  %v720 = vmul.f32 %v680, %v706
  %v721 = vmul.f32 %v681, %v711
  %v722 = vmul.f32 %v682, %v711
  %v723 = vpack.c.bf16 %v715, %v713
  %v724 = vpack.c.bf16 %v716, %v714
  %v725 = vpack.c.bf16 %v719, %v717
  %v726 = vpack.c.bf16 %v720, %v718
  %v727 = vpack.c.bf16 %v721, %v721
  %v728 = vpack.c.bf16 %v722, %v722
  %vm729 = vsmask.f32 256
  %v731 = vshrl.u32 %v723, 16
  %v733 = vrot.slane %v731, 7
  %v734 = vshll.u32 %v723, 16
  %v736 = vor.u32 %v733, %v734
  %v738 = vshrl.u32 %v724, 16
  %v740 = vrot.slane %v738, 7
  %v741 = vshll.u32 %v724, 16
  %v743 = vor.u32 %v740, %v741
  %v745 = vshrl.u32 %v725, 16
  %v747 = vrot.slane %v745, 7
  %v748 = vshll.u32 %v725, 16
  %v750 = vor.u32 %v747, %v748
  %v751 = vsel %vm729, %v733, %v750
  %v753 = vshrl.u32 %v726, 16
  %v755 = vrot.slane %v753, 7
  %v756 = vshll.u32 %v726, 16
  %v758 = vor.u32 %v755, %v756
  %v759 = vsel %vm729, %v740, %v758
  %v761 = vshrl.u32 %v727, 16
  %v763 = vrot.slane %v761, 7
  %v764 = vshll.u32 %v727, 16
  %v766 = vor.u32 %v763, %v764
  %v767 = vsel %vm729, %v747, %v766
  %v769 = vshrl.u32 %v728, 16
  %v771 = vrot.slane %v769, 7
  %v772 = vshll.u32 %v728, 16
  %v774 = vor.u32 %v771, %v772
  %v775 = vsel %vm729, %v755, %v774
  %vm781 = vcmask 1040384
  %vm782 = vmand %vm781, %vm729
  %v783 = vsel %vm782, 0, %v736
  %v784 = vsel %vm782, 0, %v743
  %vm785 = vcmask 1041408
  %vm786 = vsmask.f32 1280
  %vm787 = vmand %vm785, %vm786
  %v788 = vsel %vm787, %v767, 0
  %v789 = vsel %vm787, %v775, 0
  %v790 = vld [vmem:[%s3] sm:$0xf]
  %v791 = vld [vmem:[%s3 + $0x4] sm:$0xf]
  %v792 = vld [vmem:[%s3 + $0x8] sm:$0xf]
  %v793 = vld [vmem:[%s3 + $0xc] sm:$0xf]
  %v794 = vld [vmem:[%s3 + $0x10] sm:$0xf]
  %v795 = vld [vmem:[%s3 + $0x14] sm:$0xf]
  %v796 = vld [vmem:[%s3 + $0x18] sm:$0xf]
  %v797 = vld [vmem:[%s3 + $0x1c] sm:$0xf]
  %v798 = vld [vmem:[%s3 + $0x20] sm:$0xf]
  %v799 = vld [vmem:[%s3 + $0x24] sm:$0xf]
  %v800 = vld [vmem:[%s3 + $0x28] sm:$0xf]
  %v801 = vld [vmem:[%s3 + $0x2c] sm:$0xf]
  %v802 = vld [vmem:[%s3 + $0x30] sm:$0xf]
  %v803 = vld [vmem:[%s3 + $0x34] sm:$0xf]
  %v804 = vld [vmem:[%s3 + $0x38] sm:$0xf]
  %v805 = vld [vmem:[%s3 + $0x3c] sm:$0xf]
  %v806 = vld [vmem:[%s3 + $0x40] sm:$0xf]
  %v807 = vld [vmem:[%s3 + $0x44] sm:$0xf]
  %s808 = scalar_lea.vmem %s3, 72
  %v809 = vld [vmem:[%s808] sm:$0xf]
  %v810 = vld [vmem:[%s808 + $0x4] sm:$0xf]
  %v811 = vld [vmem:[%s808 + $0x8] sm:$0xf]
  %v812 = vld [vmem:[%s808 + $0xc] sm:$0xf]
  %v813 = vld [vmem:[%s808 + $0x10] sm:$0xf]
  %v814 = vld [vmem:[%s808 + $0x14] sm:$0xf]
  %v815 = vld [vmem:[%s808 + $0x18] sm:$0xf]
  %v816 = vld [vmem:[%s808 + $0x1c] sm:$0xf]
  %v817 = vld [vmem:[%s808 + $0x20] sm:$0xf]
  %v818 = vld [vmem:[%s808 + $0x24] sm:$0xf]
  %v819 = vld [vmem:[%s808 + $0x28] sm:$0xf]
  %v820 = vld [vmem:[%s808 + $0x2c] sm:$0xf]
  %v821 = vld [vmem:[%s808 + $0x30] sm:$0xf]
  %v822 = vld [vmem:[%s808 + $0x34] sm:$0xf]
  %v823 = vld [vmem:[%s808 + $0x38] sm:$0xf]
  %v824 = vld [vmem:[%s808 + $0x3c] sm:$0xf]
  %v825 = vld [vmem:[%s808 + $0x40] sm:$0xf]
  %v826 = vld [vmem:[%s808 + $0x44] sm:$0xf]
  %v828 = vshrl.u32 %v783, 16
  %v830 = vshll.u32 %v783, 16
  %v832 = vrot.slane %v830, 1
  %v833 = vor.u32 %v828, %v832
  %v835 = vshll.u32 %v751, 16
  %v837 = vrot.slane %v835, 1
  %v838 = vsel %vm87, %v833, %v837
  %v840 = vshrl.u32 %v784, 16
  %v842 = vshll.u32 %v784, 16
  %v844 = vrot.slane %v842, 1
  %v845 = vor.u32 %v840, %v844
  %v847 = vshll.u32 %v759, 16
  %v849 = vrot.slane %v847, 1
  %v850 = vsel %vm87, %v845, %v849
  %v851 = vshrl.u32 %v751, 16
  %v853 = vor.u32 %v851, %v837
  %v855 = vshll.u32 %v788, 16
  %v857 = vrot.slane %v855, 1
  %v858 = vsel %vm87, %v853, %v857
  %v859 = vshrl.u32 %v759, 16
  %v861 = vor.u32 %v859, %v849
  %v863 = vshll.u32 %v789, 16
  %v865 = vrot.slane %v863, 1
  %v866 = vsel %vm87, %v861, %v865
  %v867 = vshrl.u32 %v788, 16
  %v869 = vor.u32 %v867, %v857
  %v870 = vshrl.u32 %v789, 16
  %v872 = vor.u32 %v870, %v865
  %v894 = vunpack.c.l.b16 %v809
  %v895 = vunpack.c.l.b16 %v810
  %v896 = vunpack.c.l.b16 %v811
  %v897 = vunpack.c.l.b16 %v812
  %v898 = vunpack.c.l.b16 %v813
  %v899 = vunpack.c.l.b16 %v814
  %v900 = vunpack.c.l.b16 %v815
  %v901 = vunpack.c.l.b16 %v816
  %v902 = vunpack.c.l.b16 %v817
  %v903 = vunpack.c.l.b16 %v818
  %v904 = vunpack.c.l.b16 %v819
  %v905 = vunpack.c.l.b16 %v820
  %v906 = vunpack.c.l.b16 %v821
  %v907 = vunpack.c.l.b16 %v822
  %v908 = vunpack.c.l.b16 %v823
  %v909 = vunpack.c.l.b16 %v824
  %v910 = vunpack.c.l.b16 %v825
  %v911 = vunpack.c.l.b16 %v826
  %v912 = vpack.c.b16 %v895, %v894
  %v913 = vpack.c.b16 %v897, %v896
  %v914 = vpack.c.b16 %v899, %v898
  %v915 = vpack.c.b16 %v901, %v900
  %v916 = vpack.c.b16 %v903, %v902
  %v917 = vpack.c.b16 %v905, %v904
  %v918 = vpack.c.b16 %v907, %v906
  %v919 = vpack.c.b16 %v909, %v908
  %v920 = vpack.c.b16 %v911, %v910
  %v931 = vsel %vm227, %v850, 0
  %v934 = vsel %vm227, %v866, 0
  %v937 = vsel %vm227, %v872, 0
  %939 = vmatprep.subr.bf16.mxu0 0
  %940 = vmatpush1.bf16.msra.mxu0 %v912
  %941 = vmatprep.subr.bf16.mxu0 0
  %942 = vmatpush1.bf16.msra.mxu0 %v913
  %943 = vmatprep.subr.bf16.mxu0 0
  %944 = vmatpush1.bf16.msra.mxu0 %v914
  %945 = vmatprep.subr.bf16.mxu0 0
  %946 = vmatpush1.bf16.msra.mxu0 %v915
  %947 = vmatprep.subr.bf16.mxu0 0
  %948 = vmatpush1.bf16.msra.mxu0 %v916
  %949 = vmatprep.subr.bf16.mxu0 0
  %950 = vmatpush1.bf16.msra.mxu0 %v917
  %951 = vmatprep.subr.bf16.mxu0 0
  %952 = vmatpush1.bf16.msra.mxu0 %v918
  %953 = vmatprep.subr.bf16.mxu0 0
  %954 = vmatpush1.bf16.msra.mxu0 %v919
  %955 = vmatprep.subr.bf16.mxu0 0
  %956 = vmatpush1.bf16.msra.mxu0 %v920
  %957 = vmatprep.subr.bf16.mxu0 0
  %958 = vmatpush1.bf16.msra.mxu0 0
  %959 = vmatprep.subr.bf16.mxu0 0
  %960 = vmatpush1.bf16.msra.mxu0 0
  %961 = vmatprep.subr.bf16.mxu0 0
  %962 = vmatpush1.bf16.msra.mxu0 0
  %963 = vmatprep.subr.bf16.mxu0 0
  %964 = vmatpush1.bf16.msra.mxu0 0
  %965 = vmatprep.subr.bf16.mxu0 0
  %966 = vmatpush1.bf16.msra.mxu0 0
  %967 = vmatprep.subr.bf16.mxu0 0
  %968 = vmatpush1.bf16.msra.mxu0 0
  %969 = vmatprep.subr.bf16.mxu0 0
  %970 = vmatpush1.bf16.msra.mxu0 0
  %971 = vmatprep.mubr.bf16.mxu0 %v931
  %972 = vmatmul.mubr.bf16.gmra.mrb[0].mxu0 %v838
  %v973 = vpop.f32.mrb[0].mxu0
  %v974 = vadd.f32 0.0, %v973
  %v975 = vpop.f32.mrb[0].mxu0
  %v976 = vpop.f32.mrb[0].mxu0
  %v977 = vadd.f32 0.0, %v976
  %v978 = vpop.f32.mrb[0].mxu0
  %979 = vmatprep.mubr.bf16.mxu0 %v934
  %980 = vmatmul.mubr.bf16.gmra.mrb[0].mxu0 %v858
  %v981 = vpop.f32.mrb[0].mxu0
  %v982 = vadd.f32 0.0, %v981
  %v983 = vpop.f32.mrb[0].mxu0
  %v984 = vpop.f32.mrb[0].mxu0
  %v985 = vadd.f32 0.0, %v984
  %v986 = vpop.f32.mrb[0].mxu0
  %987 = vmatprep.mubr.bf16.mxu0 %v937
  %988 = vmatmul.mubr.bf16.gmra.mrb[0].mxu0 %v869
  %v989 = vpop.f32.mrb[0].mxu0
  %v990 = vadd.f32 0.0, %v989
  %v991 = vpop.f32.mrb[0].mxu0
  %v992 = vpop.f32.mrb[0].mxu0
  %v993 = vpop.f32.mrb[0].mxu0
  %994 = vdwg.mxu0
  %v1013 = vunpack.c.l.b16 %v790
  %v1014 = vunpack.c.l.b16 %v791
  %v1015 = vunpack.c.l.b16 %v792
  %v1016 = vunpack.c.l.b16 %v793
  %v1017 = vunpack.c.l.b16 %v794
  %v1018 = vunpack.c.l.b16 %v795
  %v1019 = vunpack.c.l.b16 %v796
  %v1020 = vunpack.c.l.b16 %v797
  %v1021 = vunpack.c.l.b16 %v798
  %v1022 = vunpack.c.l.b16 %v799
  %v1023 = vunpack.c.l.b16 %v800
  %v1024 = vunpack.c.l.b16 %v801
  %v1025 = vunpack.c.l.b16 %v802
  %v1026 = vunpack.c.l.b16 %v803
  %v1027 = vunpack.c.l.b16 %v804
  %v1028 = vunpack.c.l.b16 %v805
  %v1029 = vunpack.c.l.b16 %v806
  %v1030 = vunpack.c.l.b16 %v807
  %v1031 = vpack.c.b16 %v1014, %v1013
  %v1032 = vpack.c.b16 %v1016, %v1015
  %v1033 = vpack.c.b16 %v1018, %v1017
  %v1034 = vpack.c.b16 %v1020, %v1019
  %v1035 = vpack.c.b16 %v1022, %v1021
  %v1036 = vpack.c.b16 %v1024, %v1023
  %v1037 = vpack.c.b16 %v1026, %v1025
  %v1038 = vpack.c.b16 %v1028, %v1027
  %v1039 = vpack.c.b16 %v1030, %v1029
  %v1049 = vsel %vm227, %v784, 0
  %v1051 = vsel %vm227, %v759, 0
  %v1053 = vsel %vm227, %v789, 0
  %1055 = vmatprep.subr.bf16.mxu0 0
  %1056 = vmatpush1.bf16.msra.mxu0 %v1031
  %1057 = vmatprep.subr.bf16.mxu0 0
  %1058 = vmatpush1.bf16.msra.mxu0 %v1032
  %1059 = vmatprep.subr.bf16.mxu0 0
  %1060 = vmatpush1.bf16.msra.mxu0 %v1033
  %1061 = vmatprep.subr.bf16.mxu0 0
  %1062 = vmatpush1.bf16.msra.mxu0 %v1034
  %1063 = vmatprep.subr.bf16.mxu0 0
  %1064 = vmatpush1.bf16.msra.mxu0 %v1035
  %1065 = vmatprep.subr.bf16.mxu0 0
  %1066 = vmatpush1.bf16.msra.mxu0 %v1036
  %1067 = vmatprep.subr.bf16.mxu0 0
  %1068 = vmatpush1.bf16.msra.mxu0 %v1037
  %1069 = vmatprep.subr.bf16.mxu0 0
  %1070 = vmatpush1.bf16.msra.mxu0 %v1038
  %1071 = vmatprep.subr.bf16.mxu0 0
  %1072 = vmatpush1.bf16.msra.mxu0 %v1039
  %1073 = vmatprep.subr.bf16.mxu0 0
  %1074 = vmatpush1.bf16.msra.mxu0 0
  %1075 = vmatprep.subr.bf16.mxu0 0
  %1076 = vmatpush1.bf16.msra.mxu0 0
  %1077 = vmatprep.subr.bf16.mxu0 0
  %1078 = vmatpush1.bf16.msra.mxu0 0
  %1079 = vmatprep.subr.bf16.mxu0 0
  %1080 = vmatpush1.bf16.msra.mxu0 0
  %1081 = vmatprep.subr.bf16.mxu0 0
  %1082 = vmatpush1.bf16.msra.mxu0 0
  %1083 = vmatprep.subr.bf16.mxu0 0
  %1084 = vmatpush1.bf16.msra.mxu0 0
  %1085 = vmatprep.subr.bf16.mxu0 0
  %1086 = vmatpush1.bf16.msra.mxu0 0
  %1087 = vmatprep.mubr.bf16.mxu0 %v1049
  %1088 = vmatmul.mubr.bf16.gmra.mrb[0].mxu0 %v783
  %v1089 = vpop.f32.mrb[0].mxu0
  %v1090 = vadd.f32 %v974, %v1089
  %v1091 = vpop.f32.mrb[0].mxu0
  %v1092 = vpop.f32.mrb[0].mxu0
  %v1093 = vadd.f32 %v977, %v1092
  %v1094 = vpop.f32.mrb[0].mxu0
  %1095 = vmatprep.mubr.bf16.mxu0 %v1051
  %1096 = vmatmul.mubr.bf16.gmra.mrb[0].mxu0 %v751
  %v1097 = vpop.f32.mrb[0].mxu0
  %v1098 = vadd.f32 %v982, %v1097
  %v1099 = vpop.f32.mrb[0].mxu0
  %v1100 = vpop.f32.mrb[0].mxu0
  %v1101 = vadd.f32 %v985, %v1100
  %v1102 = vpop.f32.mrb[0].mxu0
  %1103 = vmatprep.mubr.bf16.mxu0 %v1053
  %1104 = vmatmul.mubr.bf16.gmra.mrb[0].mxu0 %v788
  %v1105 = vpop.f32.mrb[0].mxu0
  %v1106 = vadd.f32 %v990, %v1105
  %v1107 = vpop.f32.mrb[0].mxu0
  %v1108 = vpop.f32.mrb[0].mxu0
  %v1109 = vpop.f32.mrb[0].mxu0
  %1110 = vdwg.mxu0
  %s1111 = scalar_lea.vmem %s3, 144
  %v1112 = vld [vmem:[%s1111] sm:$0xf]
  %v1113 = vld [vmem:[%s1111 + $0x4] sm:$0xf]
  %v1114 = vld [vmem:[%s1111 + $0x8] sm:$0xf]
  %v1115 = vld [vmem:[%s1111 + $0xc] sm:$0xf]
  %v1116 = vld [vmem:[%s1111 + $0x10] sm:$0xf]
  %v1117 = vld [vmem:[%s1111 + $0x14] sm:$0xf]
  %v1118 = vld [vmem:[%s1111 + $0x18] sm:$0xf]
  %v1119 = vld [vmem:[%s1111 + $0x1c] sm:$0xf]
  %v1120 = vld [vmem:[%s1111 + $0x20] sm:$0xf]
  %v1121 = vld [vmem:[%s1111 + $0x24] sm:$0xf]
  %v1122 = vld [vmem:[%s1111 + $0x28] sm:$0xf]
  %v1123 = vld [vmem:[%s1111 + $0x2c] sm:$0xf]
  %v1124 = vld [vmem:[%s1111 + $0x30] sm:$0xf]
  %v1125 = vld [vmem:[%s1111 + $0x34] sm:$0xf]
  %v1126 = vld [vmem:[%s1111 + $0x38] sm:$0xf]
  %v1127 = vld [vmem:[%s1111 + $0x3c] sm:$0xf]
  %v1128 = vld [vmem:[%s1111 + $0x40] sm:$0xf]
  %v1129 = vld [vmem:[%s1111 + $0x44] sm:$0xf]
  %v1134 = vrot.slane %v783, 1
  %v1135 = vrot.slane %v751, 1
  %v1136 = vsel %vm477, %v1134, %v1135
  %v1137 = vrot.slane %v784, 1
  %v1138 = vrot.slane %v759, 1
  %v1139 = vsel %vm477, %v1137, %v1138
  %v1140 = vrot.slane %v788, 1
  %v1141 = vsel %vm477, %v1135, %v1140
  %v1142 = vrot.slane %v789, 1
  %v1143 = vsel %vm477, %v1138, %v1142
  %v1165 = vunpack.c.l.b16 %v1112
  %v1166 = vunpack.c.l.b16 %v1113
  %v1167 = vunpack.c.l.b16 %v1114
  %v1168 = vunpack.c.l.b16 %v1115
  %v1169 = vunpack.c.l.b16 %v1116
  %v1170 = vunpack.c.l.b16 %v1117
  %v1171 = vunpack.c.l.b16 %v1118
  %v1172 = vunpack.c.l.b16 %v1119
  %v1173 = vunpack.c.l.b16 %v1120
  %v1174 = vunpack.c.l.b16 %v1121
  %v1175 = vunpack.c.l.b16 %v1122
  %v1176 = vunpack.c.l.b16 %v1123
  %v1177 = vunpack.c.l.b16 %v1124
  %v1178 = vunpack.c.l.b16 %v1125
  %v1179 = vunpack.c.l.b16 %v1126
  %v1180 = vunpack.c.l.b16 %v1127
  %v1181 = vunpack.c.l.b16 %v1128
  %v1182 = vunpack.c.l.b16 %v1129
  %v1183 = vpack.c.b16 %v1166, %v1165
  %v1184 = vpack.c.b16 %v1168, %v1167
  %v1185 = vpack.c.b16 %v1170, %v1169
  %v1186 = vpack.c.b16 %v1172, %v1171
  %v1187 = vpack.c.b16 %v1174, %v1173
  %v1188 = vpack.c.b16 %v1176, %v1175
  %v1189 = vpack.c.b16 %v1178, %v1177
  %v1190 = vpack.c.b16 %v1180, %v1179
  %v1191 = vpack.c.b16 %v1182, %v1181
  %v1202 = vsel %vm227, %v1139, 0
  %v1205 = vsel %vm227, %v1143, 0
  %v1208 = vsel %vm227, %v1142, 0
  %1210 = vmatprep.subr.bf16.mxu0 0
  %1211 = vmatpush1.bf16.msra.mxu0 %v1183
  %1212 = vmatprep.subr.bf16.mxu0 0
  %1213 = vmatpush1.bf16.msra.mxu0 %v1184
  %1214 = vmatprep.subr.bf16.mxu0 0
  %1215 = vmatpush1.bf16.msra.mxu0 %v1185
  %1216 = vmatprep.subr.bf16.mxu0 0
  %1217 = vmatpush1.bf16.msra.mxu0 %v1186
  %1218 = vmatprep.subr.bf16.mxu0 0
  %1219 = vmatpush1.bf16.msra.mxu0 %v1187
  %1220 = vmatprep.subr.bf16.mxu0 0
  %1221 = vmatpush1.bf16.msra.mxu0 %v1188
  %1222 = vmatprep.subr.bf16.mxu0 0
  %1223 = vmatpush1.bf16.msra.mxu0 %v1189
  %1224 = vmatprep.subr.bf16.mxu0 0
  %1225 = vmatpush1.bf16.msra.mxu0 %v1190
  %1226 = vmatprep.subr.bf16.mxu0 0
  %1227 = vmatpush1.bf16.msra.mxu0 %v1191
  %1228 = vmatprep.subr.bf16.mxu0 0
  %1229 = vmatpush1.bf16.msra.mxu0 0
  %1230 = vmatprep.subr.bf16.mxu0 0
  %1231 = vmatpush1.bf16.msra.mxu0 0
  %1232 = vmatprep.subr.bf16.mxu0 0
  %1233 = vmatpush1.bf16.msra.mxu0 0
  %1234 = vmatprep.subr.bf16.mxu0 0
  %1235 = vmatpush1.bf16.msra.mxu0 0
  %1236 = vmatprep.subr.bf16.mxu0 0
  %1237 = vmatpush1.bf16.msra.mxu0 0
  %1238 = vmatprep.subr.bf16.mxu0 0
  %1239 = vmatpush1.bf16.msra.mxu0 0
  %1240 = vmatprep.subr.bf16.mxu0 0
  %1241 = vmatpush1.bf16.msra.mxu0 0
  %1242 = vmatprep.mubr.bf16.mxu0 %v1202
  %1243 = vmatmul.mubr.bf16.gmra.mrb[0].mxu0 %v1136
  %v1244 = vpop.f32.mrb[0].mxu0
  %v1245 = vadd.f32 0.0, %v1244
  %v1246 = vpop.f32.mrb[0].mxu0
  %v1247 = vpop.f32.mrb[0].mxu0
  %v1248 = vadd.f32 0.0, %v1247
  %v1249 = vpop.f32.mrb[0].mxu0
  %1250 = vmatprep.mubr.bf16.mxu0 %v1205
  %1251 = vmatmul.mubr.bf16.gmra.mrb[0].mxu0 %v1141
  %v1252 = vpop.f32.mrb[0].mxu0
  %v1253 = vadd.f32 0.0, %v1252
  %v1254 = vpop.f32.mrb[0].mxu0
  %v1255 = vpop.f32.mrb[0].mxu0
  %v1256 = vadd.f32 0.0, %v1255
  %v1257 = vpop.f32.mrb[0].mxu0
  %1258 = vmatprep.mubr.bf16.mxu0 %v1208
  %1259 = vmatmul.mubr.bf16.gmra.mrb[0].mxu0 %v1140
  %v1260 = vpop.f32.mrb[0].mxu0
  %v1261 = vadd.f32 0.0, %v1260
  %v1262 = vpop.f32.mrb[0].mxu0
  %v1263 = vpop.f32.mrb[0].mxu0
  %v1264 = vpop.f32.mrb[0].mxu0
  %1265 = vdwg.mxu0
  %v1266 = vadd.f32 %v1090, %v1245
  %v1267 = vadd.f32 %v1093, %v1248
  %v1268 = vadd.f32 %v1098, %v1253
  %v1269 = vadd.f32 %v1101, %v1256
  %v1270 = vadd.f32 %v1106, %v1261
  %v1271 = vld [vmem:[%s4] sm:$0x1]
  %v1273 = vlaneseq
  %v1274 = vshrl.u32 %v1273, 7
  %v1275 = vsub.s32 0, %v1274
  %v1276 = vrot.slane %v1271, %v1275
  %v1278 = vadd.f32 %v1266, %v1276
  %v1279 = vadd.f32 %v1267, %v1276
  %v1280 = vadd.f32 %v1268, %v1276
  %v1281 = vadd.f32 %v1269, %v1276
  %v1282 = vadd.f32 %v1270, %v1276
  %1283 = vst [vmem:[%s6] sm:$0xff] %v1278
  %1284 = vst [vmem:[%s6 + $0x8] sm:$0xff] %v1279
  %s1285 = scalar_lea.vmem %s6, 16
  %1286 = vst [vmem:[%s1285 - $0x2] sm:$0xfc] %v1280
  %1287 = vst [vmem:[%s1285 + $0x6] sm:$0xff] %v1281
  %1288 = vst [vmem:[%s1285 + $0xe] sm:$0x3] %v1282
  // Predicated region
  $region26: #{unet_up_pallas.1} parent=0 // pred_check
    _
  $region27: #{unet_up_pallas.1} parent=0 // pred_check_branch
    %1290 = sbr.rel (0) target = $region29
  $region28: #{unet_up_pallas.1} parent=0 // pred_region
    _
  $region29: #{unet_up_pallas.1} parent=0 // pred_fallthru
    _
  // Predicated region
  $region30: #{unet_up_pallas.1} parent=0 // pred_check
    _
  $region31: #{unet_up_pallas.1} parent=0 // pred_check_branch
    %1292 = sbr.rel (0) target = $region33
  $region32: #{unet_up_pallas.1} parent=0 // pred_region
    _
  $region33: #{unet_up_pallas.1} parent=0 // pred_fallthru
    _

</llo_original>
